<compile_context>
chip_gen: v7x
topology: tpu7x:2x2x1
jax: 0.10.0
libtpu: 0.0.40
codegen_flags: <defaults>
</compile_context>

<pallas_src>
import functools

import jax
import jax.numpy as jnp
from jax.experimental import pallas as pl
from jax.experimental.pallas import tpu as pltpu


_VMEM_LIMIT = 48 * 1024 * 1024  # leaves headroom even on v7x's 64 MiB VMEM


# ----------------------------------------------------------------------------
# Tile-size helpers
# ----------------------------------------------------------------------------
def _round_up(x, m):
    return ((x + m - 1) // m) * m


def _pick_tile(dim, pref, align):
    """Tile size for one axis.

    - dim <= pref: use the full extent (always a legal Pallas block).
    - otherwise: largest multiple of `align` <= pref that divides dim.
    - no such divisor: fall back to the aligned preference (never the raw
      dim); the wrapper zero-pads the operand to a multiple of the tile.
    """
    if dim <= pref:
        return dim
    t = (pref // align) * align
    while t >= align:
        if dim % t == 0:
            return t
        t -= align
    return (pref // align) * align


def _pad_to(a, shape):
    pads = tuple((0, t - s) for s, t in zip(a.shape, shape))
    if any(p[1] for p in pads):
        a = jnp.pad(a, pads)
    return a


# ----------------------------------------------------------------------------
# Pallas kernels
# ----------------------------------------------------------------------------
def _linear_act_single_k_kernel(x_ref, w_ref, b_ref, o_ref, *, apply_relu):
    """Fused y = act(x @ W + b), whole K in one block (no accumulator)."""
    x = x_ref[...]
    w = w_ref[...]
    if x.dtype != w.dtype:
        x = x.astype(w.dtype)  # bf16 MXU path; cast is a free VPU op
    y = jnp.dot(x, w, preferred_element_type=jnp.float32)
    y = y + b_ref[...].astype(jnp.float32)
    if apply_relu:
        y = jnp.maximum(y, 0.0)
    o_ref[...] = y.astype(o_ref.dtype)


def _linear_act_kloop_kernel(x_ref, w_ref, b_ref, o_ref, acc_ref, *, apply_relu):
    """Fused y = act(x @ W + b) with f32 accumulation over the K grid axis."""
    @pl.when(pl.program_id(2) == 0)
    def _():
        acc_ref[...] = jnp.zeros_like(acc_ref)

    x = x_ref[...]
    w = w_ref[...]
    if x.dtype != w.dtype:
        x = x.astype(w.dtype)
    acc_ref[...] += jnp.dot(x, w, preferred_element_type=jnp.float32)

    @pl.when(pl.program_id(2) == pl.num_programs(2) - 1)
    def _():
        y = acc_ref[...] + b_ref[...].astype(jnp.float32)
        if apply_relu:
            y = jnp.maximum(y, 0.0)
        o_ref[...] = y.astype(o_ref.dtype)


def _relu_kernel(x_ref, o_ref):
    o_ref[...] = jnp.maximum(x_ref[...], 0.0)


# ----------------------------------------------------------------------------
# Pallas-backed "modules"
# ----------------------------------------------------------------------------
class PallasLinear:
    """nn.Linear equivalent: y = x @ W + b (W stored pre-transposed as (K, N)).

    W defaults to bf16 (f32 accumulation on the MXU); bias stays f32.
    Optional fused ReLU epilogue (apply_relu=True) so Linear->ReLU chains run
    as a single pallas_call.  tm/tn/tk can be overridden for testing/tuning.
    """

    def __init__(self, in_features, out_features, key,
                 param_dtype=jnp.bfloat16, tm=None, tn=None, tk=None):
        kw, kb = jax.random.split(key)
        bound = 1.0 / (in_features ** 0.5)
        self.w = jax.random.uniform(
            kw, (in_features, out_features), jnp.float32, -bound, bound
        ).astype(param_dtype)
        self.b = jax.random.uniform(
            kb, (1, out_features), jnp.float32, -bound, bound
        )  # bias kept f32: negligible bytes, applied in the f32 epilogue
        self._tm, self._tn, self._tk = tm, tn, tk

    def __call__(self, x, apply_relu=False):
        m, k = x.shape
        k2, n = self.w.shape
        assert k == k2, f"shape mismatch: x {x.shape} vs w {self.w.shape}"

        tm = self._tm or _pick_tile(m, 512, 128)
        tk = self._tk or _pick_tile(k, 512, 128)
        tn = self._tn or _pick_tile(n, 1024, 128)

        # Small-M megacore heuristic (v7x has 2 TCs that only split work along
        # "parallel" axes): with a single row-block, halve the column tile so
        # the j axis has >= 2 blocks.
        if self._tn is None and _round_up(m, tm) // tm == 1 \
                and tn >= n and n % 256 == 0:
            tn = n // 2

        # Pad ragged dims to tile multiples (zero K-padding contributes 0 to
        # the matmul; extra M/N rows/cols are sliced off below).
        mp, kp, np_ = _round_up(m, tm), _round_up(k, tk), _round_up(n, tn)
        xp = _pad_to(x, (mp, kp))
        wp = _pad_to(self.w, (kp, np_))
        bp = _pad_to(self.b, (1, np_))

        grid_k = kp // tk
        out_isz = jnp.dtype(x.dtype).itemsize
        x_isz = jnp.dtype(x.dtype).itemsize
        w_isz = jnp.dtype(self.w.dtype).itemsize

        # Double-buffered VMEM footprint (inputs + output) + f32 accumulator.
        est = (2 * (tm * tk * x_isz + tk * tn * w_isz + tn * 4)
               + 2 * tm * tn * out_isz
               + (tm * tn * 4 if grid_k > 1 else 0))
        assert est <= _VMEM_LIMIT, f"tile config exceeds VMEM budget: {est} B"

        if grid_k == 1:
            kernel = functools.partial(
                _linear_act_single_k_kernel, apply_relu=apply_relu)
            grid_spec = pltpu.PrefetchScalarGridSpec(
                num_scalar_prefetch=0,
                grid=(mp // tm, np_ // tn),
                in_specs=[
                    pl.BlockSpec((tm, tk), lambda i, j: (i, 0)),
                    pl.BlockSpec((tk, tn), lambda i, j: (0, j)),
                    pl.BlockSpec((1, tn), lambda i, j: (0, j)),
                ],
                out_specs=pl.BlockSpec((tm, tn), lambda i, j: (i, j)),
            )
            dims = ("parallel", "parallel")
        else:
            kernel = functools.partial(
                _linear_act_kloop_kernel, apply_relu=apply_relu)
            grid_spec = pltpu.PrefetchScalarGridSpec(
                num_scalar_prefetch=0,
                grid=(mp // tm, np_ // tn, grid_k),
                in_specs=[
                    pl.BlockSpec((tm, tk), lambda i, j, kk: (i, kk)),
                    pl.BlockSpec((tk, tn), lambda i, j, kk: (kk, j)),
                    pl.BlockSpec((1, tn), lambda i, j, kk: (0, j)),
                ],
                out_specs=pl.BlockSpec((tm, tn), lambda i, j, kk: (i, j)),
                scratch_shapes=[pltpu.VMEM((tm, tn), jnp.float32)],
            )
            dims = ("parallel", "parallel", "arbitrary")

        out = pl.pallas_call(
            kernel,
            out_shape=jax.ShapeDtypeStruct((mp, np_), x.dtype),
            grid_spec=grid_spec,
            compiler_params=pltpu.CompilerParams(
                dimension_semantics=dims,
                vmem_limit_bytes=_VMEM_LIMIT,
            ),
        )(xp, wp, bp)

        if (mp, np_) != (m, n):
            out = out[:m, :n]
        return out


class PallasReLU:
    """Standalone ReLU kernel (only used when not fused into a PallasLinear)."""

    def __call__(self, x):
        m, n = x.shape
        tm = _pick_tile(m, 1024, 8)
        tn = _pick_tile(n, 1024, 128)
        mp, np_ = _round_up(m, tm), _round_up(n, tn)
        xp = _pad_to(x, (mp, np_))

        isz = jnp.dtype(x.dtype).itemsize
        assert 4 * tm * tn * isz <= _VMEM_LIMIT

        out = pl.pallas_call(
            _relu_kernel,
            out_shape=jax.ShapeDtypeStruct((mp, np_), x.dtype),
            grid=(mp // tm, np_ // tn),
            in_specs=[pl.BlockSpec((tm, tn), lambda i, j: (i, j))],
            out_specs=pl.BlockSpec((tm, tn), lambda i, j: (i, j)),
            compiler_params=pltpu.CompilerParams(
                dimension_semantics=("parallel", "parallel"),
                vmem_limit_bytes=_VMEM_LIMIT,
            ),
        )(xp)

        if (mp, np_) != (m, n):
            out = out[:m, :n]
        return out


# ----------------------------------------------------------------------------
# ModularNetwork container (mirrors the PyTorch class)
# ----------------------------------------------------------------------------
class ModularNetwork:
    def __init__(self):
        self.modules_list = []

    def add_module(self, module):
        self.modules_list.append(module)

    def forward(self, x):
        # Empty ModuleList: identity — a true no-op (no kernel launch, no HBM
        # traffic), exactly matching the PyTorch forward.
        mods = self.modules_list
        i = 0
        while i < len(mods):
            m = mods[i]
            # Fuse Linear -> ReLU pairs into a single pallas_call.
            if (isinstance(m, PallasLinear)
                    and i + 1 < len(mods)
                    and isinstance(mods[i + 1], PallasReLU)):
                x = m(x, apply_relu=True)
                i += 2
            else:
                x = m(x)
                i += 1
        return x

    __call__ = forward


# ----------------------------------------------------------------------------
if __name__ == "__main__":
    key = jax.random.PRNGKey(0)
    kx, k1, k2, k3 = jax.random.split(key, 4)
    HI = jax.lax.Precision.HIGHEST

    M, N = 8, 128  # batch=8, features=128 (lane-dense)
    x = jax.random.normal(kx, (M, N), dtype=jnp.float32)

    # 1) Exact semantics of the module as written: empty list -> identity.
    net = ModularNetwork()
    y_empty = jax.block_until_ready(net(x))
    assert y_empty.shape == x.shape
    assert jnp.allclose(y_empty, x)

    # 2) Linear(bf16 W) + ReLU added separately, fused at forward (K==1 path).
    net2 = ModularNetwork()
    net2.add_module(PallasLinear(N, N, k1))          # bf16 weights (default)
    net2.add_module(PallasReLU())
    y = jax.block_until_ready(net2(x))
    assert y.shape == (M, N)

    lin = net2.modules_list[0]
    x_q = x.astype(jnp.bfloat16).astype(jnp.float32)  # kernel feeds bf16 to MXU
    y_ref = jnp.maximum(
        jnp.dot(x_q, lin.w.astype(jnp.float32), precision=HI) + lin.b, 0.0)
    assert jnp.allclose(y, y_ref, atol=5e-4, rtol=5e-4)

    # 3) Standalone ReLU module (non-fused elementwise kernel).
    net3 = ModularNetwork()
    net3.add_module(PallasReLU())
    y3 = jax.block_until_ready(net3(x))
    assert jnp.allclose(y3, jnp.maximum(x, 0.0))

    # 4) Multi-K accumulator path (tk override forces 2 K-steps) + chained
    #    Linear without ReLU (f32 params to exercise that path too).
    K2 = 256
    x2 = jax.random.normal(kx, (M, K2), dtype=jnp.float32)
    lin_a = PallasLinear(K2, N, k2, param_dtype=jnp.float32, tk=128)
    lin_b = PallasLinear(N, 64, k3, param_dtype=jnp.float32)
    net4 = ModularNetwork()
    net4.add_module(lin_a)
    net4.add_module(PallasReLU())
    net4.add_module(lin_b)
    y4 = jax.block_until_ready(net4(x2))

    h_ref = jnp.maximum(jnp.dot(x2, lin_a.w, precision=HI) + lin_a.b, 0.0)
    y4_ref = jnp.dot(h_ref, lin_b.w, precision=HI) + lin_b.b
    assert y4.shape == (M, 64)
    assert jnp.allclose(y4, y4_ref, atol=1e-4, rtol=1e-4)

    print("KERNEL_OK")
</pallas_src>

<mosaic_0001>
module attributes {stable_mosaic.version = 11 : i64} {
  func.func @_linear_act_single_k_kernel(%arg0: i32, %arg1: i32, %arg2: memref<8x128xf32, #tpu.memory_space<vmem>>, %arg3: memref<128x128xbf16, #tpu.memory_space<vmem>>, %arg4: memref<1x128xf32, #tpu.memory_space<vmem>>, %arg5: memref<8x128xf32, #tpu.memory_space<vmem>>) attributes {dimension_semantics = [#tpu.dimension_semantics<parallel>, #tpu.dimension_semantics<parallel>], iteration_bounds = array<i64: 1, 1>, scalar_prefetch = 0 : i64, scratch_operands = 0 : i64, tpu.core_type = #tpu.core_type<tc>, window_params = [{transform_indices = @transform_0, window_bounds = array<i64: 8, 128>}, {transform_indices = @transform_1, window_bounds = array<i64: 128, 128>}, {transform_indices = @transform_2, window_bounds = array<i64: 1, 128>}, {transform_indices = @transform_3, window_bounds = array<i64: 8, 128>}]} {
    %c0 = arith.constant 0 : index
    %c0_0 = arith.constant 0 : index
    %0 = vector.load %arg2[%c0, %c0_0] : memref<8x128xf32, #tpu.memory_space<vmem>>, vector<8x128xf32>
    %c0_1 = arith.constant 0 : index
    %c0_2 = arith.constant 0 : index
    %1 = vector.load %arg3[%c0_1, %c0_2] : memref<128x128xbf16, #tpu.memory_space<vmem>>, vector<128x128xbf16>
    %2 = arith.truncf %0 : vector<8x128xf32> to vector<8x128xbf16>
    %cst = arith.constant dense<0.000000e+00> : vector<8x128xf32>
    %3 = tpu.matmul %2, %1, %cst {dimension_numbers = #tpu.dot_dimension_numbers<[1], [0], [0], [1], [0, 0, 1, 1], [], []>} : vector<8x128xbf16>, vector<128x128xbf16>, vector<8x128xf32> -> vector<8x128xf32>
    %c0_3 = arith.constant 0 : index
    %c0_4 = arith.constant 0 : index
    %4 = vector.load %arg4[%c0_3, %c0_4] : memref<1x128xf32, #tpu.memory_space<vmem>>, vector<1x128xf32>
    %5 = vector.broadcast %4 : vector<1x128xf32> to vector<8x128xf32>
    %6 = arith.addf %3, %5 : vector<8x128xf32>
    %cst_5 = arith.constant 0.000000e+00 : f32
    %7 = vector.broadcast %cst_5 : f32 to vector<8x128xf32>
    %8 = arith.maximumf %6, %7 : vector<8x128xf32>
    %c0_6 = arith.constant 0 : index
    %c0_7 = arith.constant 0 : index
    %9 = vector.load %arg5[%c0_6, %c0_7] : memref<8x128xf32, #tpu.memory_space<vmem>>, vector<8x128xf32>
    tpu.vector_store %arg5[%c0_6, %c0_7], %8 {strides = array<i32>} : memref<8x128xf32, #tpu.memory_space<vmem>>, vector<8x128xf32>,
    return
  }
  func.func @transform_0(%arg0: i32, %arg1: i32) -> (i32, i32) {
    %c0_i32 = arith.constant 0 : i32
    %c0_i32_0 = arith.constant 0 : i32
    return %arg0, %c0_i32 : i32, i32
  }
  func.func @transform_1(%arg0: i32, %arg1: i32) -> (i32, i32) {
    %c0_i32 = arith.constant 0 : i32
    %c0_i32_0 = arith.constant 0 : i32
    return %c0_i32, %arg1 : i32, i32
  }
  func.func @transform_2(%arg0: i32, %arg1: i32) -> (i32, i32) {
    %c0_i32 = arith.constant 0 : i32
    %c0_i32_0 = arith.constant 0 : i32
    return %c0_i32, %arg1 : i32, i32
  }
  func.func @transform_3(%arg0: i32, %arg1: i32) -> (i32, i32) {
    %c0_i32 = arith.constant 0 : i32
    return %arg0, %arg1 : i32, i32
  }
}

</mosaic_0001>

<llo_original>
// kernel: tpu_custom_call.1
$region0: #{tpu_custom_call.1}
  #allocation0 [shape = 'u32[]', space=smem, size = 0x4, offset = 0x4, fixed_abs, tag = 'smem constant byte address 0x4 - core index']
  #allocation1 [shape = 'u32[144,128]{1,0:T(1,128)}', space=vmem, size = 0x12000, scoped, tag = 'internal scratch']
  %s0 = inlined_call_operand.hbm [shape: f32[8,128], index: 0, kind: input, shape index: {}]
  %s1 = inlined_call_operand.hbm [shape: bf16[128,128], index: 1, kind: input, shape index: {}]
  %s2 = inlined_call_operand.vmem [shape: f32[1,128], index: 2, kind: input, shape index: {}]
  %s3 = inlined_call_operand.hbm [shape: f32[8,128], index: 3, kind: output, shape index: {}]
  %s4 = sld [smem:[#allocation0]]
  $region30: #{tpu_custom_call.1} parent=0
    _
  %s6 = ssub.s32 1, %s4
  %s7 = scalar_select 0, %s6, %s4
  $region1: #{tpu_custom_call.1} parent=0
    #allocation2 [shape = 'u8[4096]{0}', space=vmem, size = 0x1000, scoped, tag = 'input window, operand 0, single buffered']
    #allocation3 [shape = 's32[1]{0}', space=sflag, size = 0x4, scoped, tag = 'scoped memory for tpu_custom_call.1']
    #allocation4 [shape = 's32[1]{0}', space=sflag, size = 0x4, scoped, tag = 'scoped memory for tpu_custom_call.1']
    #allocation5 [shape = 'u8[32768]{0}', space=vmem, size = 0x8000, scoped, tag = 'input window, operand 1, single buffered']
    #allocation6 [shape = 's32[1]{0}', space=sflag, size = 0x4, scoped, tag = 'scoped memory for tpu_custom_call.1']
    #allocation7 [shape = 'u8[4096]{0}', space=vmem, size = 0x1000, scoped, tag = 'output window, operand 0, single buffered']
    %8 = vsyncpa [#allocation3], 0
    %9 = vsyncpa [#allocation6], 0
    %10 = vsyncpa [#allocation4], 0
    // Predicated region
    $region2: #{tpu_custom_call.1} parent=1 // pred_check
      _
    $region3: #{tpu_custom_call.1} parent=1 // pred_check_branch
      %12 = sbr.rel (0) target = $region5
    $region4: #{tpu_custom_call.1} parent=1 // pred_region
      %s14 = ssub.s32 128, 128
      %15 = vsyncadd [#allocation3], %s14
      %s17 = sshll.u32 [#allocation2], 4
      %s18 = int_to_ptr.vmem [resolvable:$true] %s17
      %20 = dma.hbm_to_vmem [thread:$0]  %s0, 128, %s18, [#allocation3]
    $region5: #{tpu_custom_call.1} parent=1 // pred_fallthru
      _
    // Predicated region
    $region6: #{tpu_custom_call.1} parent=1 // pred_check
      _
    $region7: #{tpu_custom_call.1} parent=1 // pred_check_branch
      %22 = sbr.rel (0) target = $region9
    $region8: #{tpu_custom_call.1} parent=1 // pred_region
      %s24 = ssub.s32 1024, 1024
      %25 = vsyncadd [#allocation6], %s24
      %s26 = sshll.u32 [#allocation5], 4
      %s27 = int_to_ptr.vmem [resolvable:$true] %s26
      %32 = dma.hbm_to_vmem [thread:$0]  %s1, 1024, %s27, [#allocation6], 64, 64, 4
    $region9: #{tpu_custom_call.1} parent=1 // pred_fallthru
      _
    // Predicated region
    $region10: #{tpu_custom_call.1} parent=1 // pred_check
      _
    $region11: #{tpu_custom_call.1} parent=1 // pred_check_branch
      %34 = sbr.rel (0) target = $region13
    $region12: #{tpu_custom_call.1} parent=1 // pred_region
      _
    $region13: #{tpu_custom_call.1} parent=1 // pred_fallthru
      _
    // Predicated region
    $region14: #{tpu_custom_call.1} parent=1 // pred_check
      _
    $region15: #{tpu_custom_call.1} parent=1 // pred_check_branch
      %36 = sbr.rel (0) target = $region17
    $region16: #{tpu_custom_call.1} parent=1 // pred_region
      %37 = dma.done [#allocation3], 128
    $region17: #{tpu_custom_call.1} parent=1 // pred_fallthru
      _
    // Predicated region
    $region18: #{tpu_custom_call.1} parent=1 // pred_check
      _
    $region19: #{tpu_custom_call.1} parent=1 // pred_check_branch
      %39 = sbr.rel (0) target = $region21
    $region20: #{tpu_custom_call.1} parent=1 // pred_region
      %40 = dma.done [#allocation6], 1024
    $region21: #{tpu_custom_call.1} parent=1 // pred_fallthru
      _
    %v42 = vld [vmem:[#allocation2] sm:$0xff]
    %v43 = vld [vmem:[#allocation5] sm:$0xf]
    %v44 = vld [vmem:[#allocation5 + $0x4] sm:$0xf]
    %v45 = vld [vmem:[#allocation5 + $0x8] sm:$0xf]
    %v46 = vld [vmem:[#allocation5 + $0xc] sm:$0xf]
    %v47 = vld [vmem:[#allocation5 + $0x10] sm:$0xf]
    %v48 = vld [vmem:[#allocation5 + $0x14] sm:$0xf]
    %v49 = vld [vmem:[#allocation5 + $0x18] sm:$0xf]
    %v50 = vld [vmem:[#allocation5 + $0x1c] sm:$0xf]
    %v51 = vld [vmem:[#allocation5 + $0x20] sm:$0xf]
    %v52 = vld [vmem:[#allocation5 + $0x24] sm:$0xf]
    %v53 = vld [vmem:[#allocation5 + $0x28] sm:$0xf]
    %v54 = vld [vmem:[#allocation5 + $0x2c] sm:$0xf]
    %v55 = vld [vmem:[#allocation5 + $0x30] sm:$0xf]
    %v56 = vld [vmem:[#allocation5 + $0x34] sm:$0xf]
    %v57 = vld [vmem:[#allocation5 + $0x38] sm:$0xf]
    %v58 = vld [vmem:[#allocation5 + $0x3c] sm:$0xf]
    %v59 = vpack.c.bf16 %v42, %v42
    %v60 = vld [vmem:[%s2] sm:$0x1]
    %v62 = vlaneseq
    %v63 = vshrl.u32 %v62, 7
    %v64 = vsub.s32 0, %v63
    %v65 = vrot.slane %v60, %v64
    %v83 = vunpack.c.l.b16 %v43
    %v84 = vunpack.c.l.b16 %v44
    %v85 = vunpack.c.l.b16 %v45
    %v86 = vunpack.c.l.b16 %v46
    %v87 = vunpack.c.l.b16 %v47
    %v88 = vunpack.c.l.b16 %v48
    %v89 = vunpack.c.l.b16 %v49
    %v90 = vunpack.c.l.b16 %v50
    %v91 = vunpack.c.l.b16 %v51
    %v92 = vunpack.c.l.b16 %v52
    %v93 = vunpack.c.l.b16 %v53
    %v94 = vunpack.c.l.b16 %v54
    %v95 = vunpack.c.l.b16 %v55
    %v96 = vunpack.c.l.b16 %v56
    %v97 = vunpack.c.l.b16 %v57
    %v98 = vunpack.c.l.b16 %v58
    %v99 = vpack.c.b16 %v84, %v83
    %v100 = vpack.c.b16 %v86, %v85
    %v101 = vpack.c.b16 %v88, %v87
    %v102 = vpack.c.b16 %v90, %v89
    %v103 = vpack.c.b16 %v92, %v91
    %v104 = vpack.c.b16 %v94, %v93
    %v105 = vpack.c.b16 %v96, %v95
    %v106 = vpack.c.b16 %v98, %v97
    %115 = vmatprep.subr.bf16.mxu0 0
    %116 = vmatpush1.bf16.msra.mxu0 %v99
    %117 = vmatprep.subr.bf16.mxu0 0
    %118 = vmatpush1.bf16.msra.mxu0 %v100
    %119 = vmatprep.subr.bf16.mxu0 0
    %120 = vmatpush1.bf16.msra.mxu0 %v101
    %121 = vmatprep.subr.bf16.mxu0 0
    %122 = vmatpush1.bf16.msra.mxu0 %v102
    %123 = vmatprep.subr.bf16.mxu0 0
    %124 = vmatpush1.bf16.msra.mxu0 %v103
    %125 = vmatprep.subr.bf16.mxu0 0
    %126 = vmatpush1.bf16.msra.mxu0 %v104
    %127 = vmatprep.subr.bf16.mxu0 0
    %128 = vmatpush1.bf16.msra.mxu0 %v105
    %129 = vmatprep.subr.bf16.mxu0 0
    %130 = vmatpush1.bf16.msra.mxu0 %v106
    %131 = vmatprep.subr.bf16.mxu0 0
    %132 = vmatpush1.bf16.msra.mxu0 0
    %133 = vmatprep.subr.bf16.mxu0 0
    %134 = vmatpush1.bf16.msra.mxu0 0
    %135 = vmatprep.subr.bf16.mxu0 0
    %136 = vmatpush1.bf16.msra.mxu0 0
    %137 = vmatprep.subr.bf16.mxu0 0
    %138 = vmatpush1.bf16.msra.mxu0 0
    %139 = vmatprep.subr.bf16.mxu0 0
    %140 = vmatpush1.bf16.msra.mxu0 0
    %141 = vmatprep.subr.bf16.mxu0 0
    %142 = vmatpush1.bf16.msra.mxu0 0
    %143 = vmatprep.subr.bf16.mxu0 0
    %144 = vmatpush1.bf16.msra.mxu0 0
    %145 = vmatprep.subr.bf16.mxu0 0
    %146 = vmatpush1.bf16.msra.mxu0 0
    %147 = vmatprep.mubr.bf16.mxu0 0
    %148 = vmatmul.mubr.bf16.gmra.mrb[0].mxu0 %v59
    %v149 = vpop.f32.mrb[0].mxu0
    %v150 = vadd.f32 %v65, %v149
    %v151 = vpop.f32.mrb[0].mxu0
    %v152 = vpop.f32.mrb[0].mxu0
    %v153 = vpop.f32.mrb[0].mxu0
    %154 = vdwg.mxu0
    %v155 = vmax.f32 %v150, 0.0
    %156 = vst [vmem:[#allocation7] sm:$0xff] %v155
    // Predicated region
    $region22: #{tpu_custom_call.1} parent=1 // pred_check
      _
    $region23: #{tpu_custom_call.1} parent=1 // pred_check_branch
      %158 = sbr.rel (0) target = $region25
    $region24: #{tpu_custom_call.1} parent=1 // pred_region
      %s160 = ssub.s32 128, 128
      %161 = vsyncadd [#allocation4], %s160
      %s163 = sshll.u32 [#allocation7], 4
      %s164 = int_to_ptr.vmem [resolvable:$true] %s163
      %166 = dma.vmem_to_hbm [thread:$0]  %s164, 128, %s3, [#allocation4]
    $region25: #{tpu_custom_call.1} parent=1 // pred_fallthru
      _
    // Predicated region
    $region26: #{tpu_custom_call.1} parent=1 // pred_check
      _
    $region27: #{tpu_custom_call.1} parent=1 // pred_check_branch
      %168 = sbr.rel (0) target = $region29
    $region28: #{tpu_custom_call.1} parent=1 // pred_region
      %169 = dma.done [#allocation4], 128
    $region29: #{tpu_custom_call.1} parent=1 // pred_fallthru
      _
    %170 = vsyncpa [#allocation3], 1
    %171 = vsyncpa [#allocation6], 1
    %172 = vsyncpa [#allocation4], 1

</llo_original>
